<compile_context>
chip_gen: v5e
topology: v5e:2x2
jax: 0.10.0
libtpu: 0.0.40
codegen_flags: <defaults>
</compile_context>

<pallas_src>
import functools

import jax
import jax.numpy as jnp
from jax.experimental import pallas as pl
from jax.experimental.pallas import tpu as pltpu

_LANE = 128
_SUBLANE = 8


def _round_up(x, m):
    return ((x + m - 1) // m) * m


def _coupling_kernel(x_ref, m_ref, omm_ref, sel_ref,
                     w1_ref, b1_ref, w2_ref, b2_ref, w3_ref, b3_ref,
                     y_ref, logdet_ref, *, dp):
    """One (TB, Dp) batch tile of the fused (tight-packed) coupling layer."""
    x = x_ref[...]                       # (TB, Dp) f32
    m = m_ref[...]                       # (1, Dp)  f32
    omm = omm_ref[...]                   # (1, Dp)  f32 == (1 - mask), 0 in padded lanes

    tb = x.shape[0]
    hc = w1_ref.shape[1]

    # Hoisted once per tile, reused by both fused-activation layers.
    sel = jnp.broadcast_to(sel_ref[...] > 0.5, (tb, hc))   # True -> tanh (scale half)

    xm = (x * m).astype(jnp.bfloat16)    # bf16 operand, f32 accumulate on MXU

    def fused_act(h):
        return jnp.where(sel, jnp.tanh(h), jnp.maximum(h, 0.0))

    h = jnp.dot(xm, w1_ref[...], preferred_element_type=jnp.float32) + b1_ref[...]
    h = fused_act(h).astype(jnp.bfloat16)
    h = jnp.dot(h, w2_ref[...], preferred_element_type=jnp.float32) + b2_ref[...]
    h = fused_act(h).astype(jnp.bfloat16)
    out = jnp.dot(h, w3_ref[...], preferred_element_type=jnp.float32) + b3_ref[...]

    # Output halves are Dp-aligned -> lane-aligned slices, no relayout.
    log_s = out[:, :dp] * omm            # (TB, Dp), zero in padded/masked lanes
    t = out[:, dp:] * omm                # (TB, Dp)

    y_ref[...] = x * jnp.exp(log_s) + t                       # lane-dense (TB, Dp) store
    logdet_ref[...] = jnp.sum(log_s, axis=-1)[None, None, :]  # lane-dense (1, 1, TB) store


def pack_coupling_params(mask, scale_params, translate_params):
    """One-time fusion + lane padding of the coupling-layer parameters.

    Tight packing: translate weights sit at column offset H (not Hp); the fused
    hidden width is Hc = round_up(2*H, 128).  W3's output halves stay at
    Dp-aligned offsets (log_s in [:D], t in [Dp:Dp+D]).
    Weights are stored as bf16 MXU operands; biases/masks stay f32.
    """
    D = int(mask.shape[0])
    H = int(scale_params[0][0].shape[1])
    Dp = _round_up(D, _LANE)
    Hc = _round_up(2 * H, _LANE)

    m32 = mask.astype(jnp.float32)
    mask_p = jnp.zeros((1, Dp), jnp.float32).at[0, :D].set(m32)
    omm_p = jnp.zeros((1, Dp), jnp.float32).at[0, :D].set(1.0 - m32)
    sel_p = jnp.zeros((1, Hc), jnp.float32).at[0, :H].set(1.0)   # tanh half selector

    (sw1, sb1), (sw2, sb2), (sw3, sb3) = [
        (w.astype(jnp.float32), b.astype(jnp.float32)) for w, b in scale_params]
    (tw1, tb1), (tw2, tb2), (tw3, tb3) = [
        (w.astype(jnp.float32), b.astype(jnp.float32)) for w, b in translate_params]

    w1 = (jnp.zeros((Dp, Hc), jnp.float32)
          .at[:D, :H].set(sw1).at[:D, H:2 * H].set(tw1).astype(jnp.bfloat16))
    b1 = jnp.zeros((1, Hc), jnp.float32).at[0, :H].set(sb1).at[0, H:2 * H].set(tb1)

    w2 = (jnp.zeros((Hc, Hc), jnp.float32)
          .at[:H, :H].set(sw2).at[H:2 * H, H:2 * H].set(tw2).astype(jnp.bfloat16))
    b2 = jnp.zeros((1, Hc), jnp.float32).at[0, :H].set(sb2).at[0, H:2 * H].set(tb2)

    w3 = (jnp.zeros((Hc, 2 * Dp), jnp.float32)
          .at[:H, :D].set(sw3).at[H:2 * H, Dp:Dp + D].set(tw3).astype(jnp.bfloat16))
    b3 = jnp.zeros((1, 2 * Dp), jnp.float32).at[0, :D].set(sb3).at[0, Dp:Dp + D].set(tb3)

    return (mask_p, omm_p, sel_p, w1, b1, w2, b2, w3, b3)


def _vmem_limit_bytes(tb, dp, hc):
    io_tiles = 2 * 2 * tb * dp * 4                         # x + y, double-buffered, f32
    logdet = 2 * tb * 4
    weights = 2 * 2 * (dp * hc + hc * hc + hc * 2 * dp)    # bf16, double-buffered
    consts = 2 * 4 * (4 * dp + 3 * hc)                     # biases / masks, f32
    interm = 6 * tb * max(hc, 2 * dp) * 4                  # activations / out / exp temps
    need = io_tiles + logdet + weights + consts + interm
    return int(min(max(2 * need, 16 * 1024 * 1024), 48 * 1024 * 1024))


@functools.partial(jax.jit, static_argnames=("block_b",))
def coupling_layer_direct(x, packed, block_b=1024):
    """Forward ('direct') pass of the RealNVP coupling layer.

    x:      (B, D) float
    packed: output of pack_coupling_params (fused, lane-padded weights/masks)
    Returns (y (B, D), log_det (B, 1)), both float32.
    """
    mask_p, omm_p, sel_p, w1, b1, w2, b2, w3, b3 = packed
    B, D = x.shape
    Dp, Hc = w1.shape
    assert w3.shape == (Hc, 2 * Dp) and mask_p.shape == (1, Dp)

    Brows = _round_up(B, _SUBLANE)
    TB = min(block_b, Brows)
    # Prefer >= 2 grid steps so both TensorCores are used on v7x.
    if Brows // TB < 2 and Brows > _SUBLANE:
        TB = _round_up((Brows + 1) // 2, _SUBLANE)
    Bp = _round_up(Brows, TB)
    ntiles = Bp // TB

    x_p = jnp.zeros((Bp, Dp), jnp.float32).at[:B, :D].set(x.astype(jnp.float32))

    row = lambda i: (i, 0)       # batch-tiled 2-D arrays
    const = lambda i: (0, 0)     # grid-invariant arrays (mask / selector / weights)

    kernel = functools.partial(_coupling_kernel, dp=Dp)

    y_p, logdet_p = pl.pallas_call(
        kernel,
        grid=(ntiles,),
        out_shape=(jax.ShapeDtypeStruct((Bp, Dp), jnp.float32),
                   jax.ShapeDtypeStruct((ntiles, 1, TB), jnp.float32)),
        in_specs=[
            pl.BlockSpec((TB, Dp), row),        # x
            pl.BlockSpec((1, Dp), const),       # mask
            pl.BlockSpec((1, Dp), const),       # 1 - mask
            pl.BlockSpec((1, Hc), const),       # activation selector (tanh half)
            pl.BlockSpec((Dp, Hc), const),      # fused W1 (tight-packed)
            pl.BlockSpec((1, Hc), const),       # fused b1
            pl.BlockSpec((Hc, Hc), const),      # fused W2 (block-diag, tight-packed)
            pl.BlockSpec((1, Hc), const),       # fused b2
            pl.BlockSpec((Hc, 2 * Dp), const),  # fused W3 (Dp-aligned output halves)
            pl.BlockSpec((1, 2 * Dp), const),   # fused b3
        ],
        out_specs=(pl.BlockSpec((TB, Dp), row),
                   pl.BlockSpec((1, 1, TB), lambda i: (i, 0, 0))),
        compiler_params=pltpu.CompilerParams(
            dimension_semantics=("parallel",),
            vmem_limit_bytes=_vmem_limit_bytes(TB, Dp, Hc)),
    )(x_p, mask_p, omm_p, sel_p, w1, b1, w2, b2, w3, b3)

    y = y_p[:B, :D]
    log_det = logdet_p.reshape(-1)[:B].reshape(B, 1)
    return y, log_det


def _init_linear(key, fan_in, fan_out):
    """Deterministic stand-in for nn.init.orthogonal_ + zero bias."""
    w = jax.random.normal(key, (fan_in, fan_out), jnp.float32) / jnp.sqrt(fan_in)
    b = jnp.zeros((fan_out,), jnp.float32)
    return w, b


def _reference(x, mask, scale_params, translate_params, matmul_dtype=jnp.float32):
    """Pure-JAX reference mirroring the PyTorch forward (mode='direct').

    matmul_dtype=jnp.bfloat16 emulates the kernel's bf16-operand / f32-accumulate
    matmuls for a tight numerical comparison.
    """
    x = x.astype(jnp.float32)
    m = mask.reshape(1, -1).astype(jnp.float32)
    xm = x * m

    def lin(z, wb):
        w, b = wb
        return jnp.dot(z.astype(matmul_dtype), w.astype(matmul_dtype),
                       preferred_element_type=jnp.float32) + b.reshape(1, -1)

    def mlp(z, params, act):
        z = act(lin(z, params[0]))
        z = act(lin(z, params[1]))
        return lin(z, params[2])

    log_s = mlp(xm, scale_params, jnp.tanh) * (1.0 - m)
    t = mlp(xm, translate_params, lambda v: jnp.maximum(v, 0.0)) * (1.0 - m)
    return x * jnp.exp(log_s) + t, jnp.sum(log_s, axis=-1, keepdims=True)


if __name__ == "__main__":
    B, D, H = 8, 16, 32          # batch, num_inputs, num_hidden

    key = jax.random.PRNGKey(0)
    kx, ks1, ks2, ks3, kt1, kt2, kt3 = jax.random.split(key, 7)

    x = jax.random.normal(kx, (B, D), jnp.float32)
    # alternating binary mask, as used for RealNVP coupling layers
    mask = (jnp.arange(D) % 2).astype(jnp.float32)

    scale_params = [_init_linear(ks1, D, H),
                    _init_linear(ks2, H, H),
                    _init_linear(ks3, H, D)]
    translate_params = [_init_linear(kt1, D, H),
                        _init_linear(kt2, H, H),
                        _init_linear(kt3, H, D)]

    # One-time parameter packing (hoisted out of the forward path).
    packed = jax.block_until_ready(
        pack_coupling_params(mask, scale_params, translate_params))

    y, logdet = coupling_layer_direct(x, packed)
    jax.block_until_ready((y, logdet))

    # Tight check against a reference that emulates the kernel's bf16 matmuls.
    y_bf, ld_bf = _reference(x, mask, scale_params, translate_params,
                             matmul_dtype=jnp.bfloat16)
    assert jnp.allclose(y, y_bf, atol=2e-3, rtol=2e-3)
    assert jnp.allclose(logdet, ld_bf, atol=2e-3, rtol=2e-3)

    # Loose sanity check against the full-f32 reference (bf16 operand error).
    y_f32, ld_f32 = _reference(x, mask, scale_params, translate_params)
    assert jnp.allclose(y, y_f32, atol=5e-2, rtol=5e-2)
    assert jnp.allclose(logdet, ld_f32, atol=2e-1, rtol=5e-2)

    # Exercise the multi-tile grid + padding paths.
    B2 = 300
    x2 = jax.random.normal(jax.random.PRNGKey(1), (B2, D), jnp.float32)
    y2_bf, ld2_bf = _reference(x2, mask, scale_params, translate_params,
                               matmul_dtype=jnp.bfloat16)

    # Default block_b: single tile is auto-split so grid >= 2 (v7x megacore path).
    y2, ld2 = coupling_layer_direct(x2, packed)
    jax.block_until_ready((y2, ld2))
    assert jnp.allclose(y2, y2_bf, atol=2e-3, rtol=2e-3)
    assert jnp.allclose(ld2, ld2_bf, atol=2e-3, rtol=2e-3)

    # Explicit small tile: grid of 3 with batch padding (B not multiple of TB).
    y3, ld3 = coupling_layer_direct(x2, packed, block_b=128)
    jax.block_until_ready((y3, ld3))
    assert jnp.allclose(y3, y2_bf, atol=2e-3, rtol=2e-3)
    assert jnp.allclose(ld3, ld2_bf, atol=2e-3, rtol=2e-3)

    print("KERNEL_OK")
</pallas_src>

<mosaic_0001>
module attributes {stable_mosaic.version = 11 : i64} {
  func.func @_coupling_kernel(%arg0: i32, %arg1: memref<8x128xf32, #tpu.memory_space<vmem>>, %arg2: memref<1x128xf32, #tpu.memory_space<vmem>>, %arg3: memref<1x128xf32, #tpu.memory_space<vmem>>, %arg4: memref<1x128xf32, #tpu.memory_space<vmem>>, %arg5: memref<128x128xbf16, #tpu.memory_space<vmem>>, %arg6: memref<1x128xf32, #tpu.memory_space<vmem>>, %arg7: memref<128x128xbf16, #tpu.memory_space<vmem>>, %arg8: memref<1x128xf32, #tpu.memory_space<vmem>>, %arg9: memref<128x256xbf16, #tpu.memory_space<vmem>>, %arg10: memref<1x256xf32, #tpu.memory_space<vmem>>, %arg11: memref<8x128xf32, #tpu.memory_space<vmem>>, %arg12: memref<1x1x8xf32, #tpu.memory_space<vmem>>) attributes {dimension_semantics = [#tpu.dimension_semantics<parallel>], iteration_bounds = array<i64: 1>, scalar_prefetch = 0 : i64, scratch_operands = 0 : i64, tpu.core_type = #tpu.core_type<tc>, window_params = [{transform_indices = @transform_0, window_bounds = array<i64: 8, 128>}, {pipeline_mode = #tpu.pipeline_mode<synchronous>, transform_indices = @transform_1, window_bounds = array<i64: 1, 128>}, {pipeline_mode = #tpu.pipeline_mode<synchronous>, transform_indices = @transform_2, window_bounds = array<i64: 1, 128>}, {pipeline_mode = #tpu.pipeline_mode<synchronous>, transform_indices = @transform_3, window_bounds = array<i64: 1, 128>}, {pipeline_mode = #tpu.pipeline_mode<synchronous>, transform_indices = @transform_4, window_bounds = array<i64: 128, 128>}, {pipeline_mode = #tpu.pipeline_mode<synchronous>, transform_indices = @transform_5, window_bounds = array<i64: 1, 128>}, {pipeline_mode = #tpu.pipeline_mode<synchronous>, transform_indices = @transform_6, window_bounds = array<i64: 128, 128>}, {pipeline_mode = #tpu.pipeline_mode<synchronous>, transform_indices = @transform_7, window_bounds = array<i64: 1, 128>}, {pipeline_mode = #tpu.pipeline_mode<synchronous>, transform_indices = @transform_8, window_bounds = array<i64: 128, 256>}, {pipeline_mode = #tpu.pipeline_mode<synchronous>, transform_indices = @transform_9, window_bounds = array<i64: 1, 256>}, {transform_indices = @transform_10, window_bounds = array<i64: 8, 128>}, {transform_indices = @transform_11, window_bounds = array<i64: 1, 1, 8>}]} {
    %c0 = arith.constant 0 : index
    %c0_0 = arith.constant 0 : index
    %0 = vector.load %arg1[%c0, %c0_0] : memref<8x128xf32, #tpu.memory_space<vmem>>, vector<8x128xf32>
    %c0_1 = arith.constant 0 : index
    %c0_2 = arith.constant 0 : index
    %1 = vector.load %arg2[%c0_1, %c0_2] : memref<1x128xf32, #tpu.memory_space<vmem>>, vector<1x128xf32>
    %c0_3 = arith.constant 0 : index
    %c0_4 = arith.constant 0 : index
    %2 = vector.load %arg3[%c0_3, %c0_4] : memref<1x128xf32, #tpu.memory_space<vmem>>, vector<1x128xf32>
    %c0_5 = arith.constant 0 : index
    %c0_6 = arith.constant 0 : index
    %3 = vector.load %arg4[%c0_5, %c0_6] : memref<1x128xf32, #tpu.memory_space<vmem>>, vector<1x128xf32>
    %cst = arith.constant 5.000000e-01 : f32
    %4 = vector.broadcast %cst : f32 to vector<1x128xf32>
    %5 = arith.cmpf ogt, %3, %4 : vector<1x128xf32>
    %6 = vector.shape_cast %5 : vector<1x128xi1> to vector<1x128xi1>
    %7 = vector.broadcast %6 : vector<1x128xi1> to vector<8x128xi1>
    %8 = vector.broadcast %1 : vector<1x128xf32> to vector<8x128xf32>
    %9 = arith.mulf %0, %8 : vector<8x128xf32>
    %10 = arith.truncf %9 : vector<8x128xf32> to vector<8x128xbf16>
    %c0_7 = arith.constant 0 : index
    %c0_8 = arith.constant 0 : index
    %11 = vector.load %arg5[%c0_7, %c0_8] : memref<128x128xbf16, #tpu.memory_space<vmem>>, vector<128x128xbf16>
    %cst_9 = arith.constant dense<0.000000e+00> : vector<8x128xf32>
    %12 = tpu.matmul %10, %11, %cst_9 {dimension_numbers = #tpu.dot_dimension_numbers<[1], [0], [0], [1], [0, 0, 1, 1], [], []>} : vector<8x128xbf16>, vector<128x128xbf16>, vector<8x128xf32> -> vector<8x128xf32>
    %c0_10 = arith.constant 0 : index
    %c0_11 = arith.constant 0 : index
    %13 = vector.load %arg6[%c0_10, %c0_11] : memref<1x128xf32, #tpu.memory_space<vmem>>, vector<1x128xf32>
    %14 = vector.broadcast %13 : vector<1x128xf32> to vector<8x128xf32>
    %15 = arith.addf %12, %14 : vector<8x128xf32>
    %16 = math.tanh %15 : vector<8x128xf32>
    %cst_12 = arith.constant 0.000000e+00 : f32
    %17 = vector.broadcast %cst_12 : f32 to vector<8x128xf32>
    %18 = arith.maximumf %15, %17 : vector<8x128xf32>
    %19 = arith.select %7, %16, %18 : vector<8x128xi1>, vector<8x128xf32>
    %20 = arith.truncf %19 : vector<8x128xf32> to vector<8x128xbf16>
    %c0_13 = arith.constant 0 : index
    %c0_14 = arith.constant 0 : index
    %21 = vector.load %arg7[%c0_13, %c0_14] : memref<128x128xbf16, #tpu.memory_space<vmem>>, vector<128x128xbf16>
    %cst_15 = arith.constant dense<0.000000e+00> : vector<8x128xf32>
    %22 = tpu.matmul %20, %21, %cst_15 {dimension_numbers = #tpu.dot_dimension_numbers<[1], [0], [0], [1], [0, 0, 1, 1], [], []>} : vector<8x128xbf16>, vector<128x128xbf16>, vector<8x128xf32> -> vector<8x128xf32>
    %c0_16 = arith.constant 0 : index
    %c0_17 = arith.constant 0 : index
    %23 = vector.load %arg8[%c0_16, %c0_17] : memref<1x128xf32, #tpu.memory_space<vmem>>, vector<1x128xf32>
    %24 = vector.broadcast %23 : vector<1x128xf32> to vector<8x128xf32>
    %25 = arith.addf %22, %24 : vector<8x128xf32>
    %26 = math.tanh %25 : vector<8x128xf32>
    %cst_18 = arith.constant 0.000000e+00 : f32
    %27 = vector.broadcast %cst_18 : f32 to vector<8x128xf32>
    %28 = arith.maximumf %25, %27 : vector<8x128xf32>
    %29 = arith.select %7, %26, %28 : vector<8x128xi1>, vector<8x128xf32>
    %30 = arith.truncf %29 : vector<8x128xf32> to vector<8x128xbf16>
    %c0_19 = arith.constant 0 : index
    %c0_20 = arith.constant 0 : index
    %31 = vector.load %arg9[%c0_19, %c0_20] : memref<128x256xbf16, #tpu.memory_space<vmem>>, vector<128x256xbf16>
    %cst_21 = arith.constant dense<0.000000e+00> : vector<8x256xf32>
    %32 = tpu.matmul %30, %31, %cst_21 {dimension_numbers = #tpu.dot_dimension_numbers<[1], [0], [0], [1], [0, 0, 1, 1], [], []>} : vector<8x128xbf16>, vector<128x256xbf16>, vector<8x256xf32> -> vector<8x256xf32>
    %c0_22 = arith.constant 0 : index
    %c0_23 = arith.constant 0 : index
    %33 = vector.load %arg10[%c0_22, %c0_23] : memref<1x256xf32, #tpu.memory_space<vmem>>, vector<1x256xf32>
    %34 = vector.broadcast %33 : vector<1x256xf32> to vector<8x256xf32>
    %35 = arith.addf %32, %34 : vector<8x256xf32>
    %36 = vector.extract_strided_slice %35 {offsets = [0, 0], sizes = [8, 128], strides = [1, 1]} : vector<8x256xf32> to vector<8x128xf32>
    %37 = vector.broadcast %2 : vector<1x128xf32> to vector<8x128xf32>
    %38 = arith.mulf %36, %37 : vector<8x128xf32>
    %39 = vector.extract_strided_slice %35 {offsets = [0, 128], sizes = [8, 128], strides = [1, 1]} : vector<8x256xf32> to vector<8x128xf32>
    %40 = vector.broadcast %2 : vector<1x128xf32> to vector<8x128xf32>
    %41 = arith.mulf %39, %40 : vector<8x128xf32>
    %42 = math.exp %38 : vector<8x128xf32>
    %43 = arith.mulf %0, %42 : vector<8x128xf32>
    %44 = arith.addf %43, %41 : vector<8x128xf32>
    %c0_24 = arith.constant 0 : index
    %c0_25 = arith.constant 0 : index
    %45 = vector.load %arg11[%c0_24, %c0_25] : memref<8x128xf32, #tpu.memory_space<vmem>>, vector<8x128xf32>
    tpu.vector_store %arg11[%c0_24, %c0_25], %44 {strides = array<i32>} : memref<8x128xf32, #tpu.memory_space<vmem>>, vector<8x128xf32>,
    %cst_26 = arith.constant dense<0.000000e+00> : vector<8xf32>
    %46 = vector.multi_reduction <add>, %38, %cst_26 [1] : vector<8x128xf32> to vector<8xf32>
    %47 = vector.shape_cast %46 : vector<8xf32> to vector<1x1x8xf32>
    %c0_27 = arith.constant 0 : index
    %c0_28 = arith.constant 0 : index
    %c0_29 = arith.constant 0 : index
    %48 = vector.load %arg12[%c0_27, %c0_28, %c0_29] : memref<1x1x8xf32, #tpu.memory_space<vmem>>, vector<1x1x8xf32>
    tpu.vector_store %arg12[%c0_27, %c0_28, %c0_29], %47 {strides = array<i32>} : memref<1x1x8xf32, #tpu.memory_space<vmem>>, vector<1x1x8xf32>,
    return
  }
  func.func @transform_0(%arg0: i32) -> (i32, i32) {
    %c0_i32 = arith.constant 0 : i32
    %c0_i32_0 = arith.constant 0 : i32
    return %arg0, %c0_i32 : i32, i32
  }
  func.func @transform_1(%arg0: i32) -> (i32, i32) {
    %c0_i32 = arith.constant 0 : i32
    %c0_i32_0 = arith.constant 0 : i32
    %c0_i32_1 = arith.constant 0 : i32
    return %c0_i32, %c0_i32_0 : i32, i32
  }
  func.func @transform_2(%arg0: i32) -> (i32, i32) {
    %c0_i32 = arith.constant 0 : i32
    %c0_i32_0 = arith.constant 0 : i32
    %c0_i32_1 = arith.constant 0 : i32
    return %c0_i32, %c0_i32_0 : i32, i32
  }
  func.func @transform_3(%arg0: i32) -> (i32, i32) {
    %c0_i32 = arith.constant 0 : i32
    %c0_i32_0 = arith.constant 0 : i32
    %c0_i32_1 = arith.constant 0 : i32
    return %c0_i32, %c0_i32_0 : i32, i32
  }
  func.func @transform_4(%arg0: i32) -> (i32, i32) {
    %c0_i32 = arith.constant 0 : i32
    %c0_i32_0 = arith.constant 0 : i32
    %c0_i32_1 = arith.constant 0 : i32
    return %c0_i32, %c0_i32_0 : i32, i32
  }
  func.func @transform_5(%arg0: i32) -> (i32, i32) {
    %c0_i32 = arith.constant 0 : i32
    %c0_i32_0 = arith.constant 0 : i32
    %c0_i32_1 = arith.constant 0 : i32
    return %c0_i32, %c0_i32_0 : i32, i32
  }
  func.func @transform_6(%arg0: i32) -> (i32, i32) {
    %c0_i32 = arith.constant 0 : i32
    %c0_i32_0 = arith.constant 0 : i32
    %c0_i32_1 = arith.constant 0 : i32
    return %c0_i32, %c0_i32_0 : i32, i32
  }
  func.func @transform_7(%arg0: i32) -> (i32, i32) {
    %c0_i32 = arith.constant 0 : i32
    %c0_i32_0 = arith.constant 0 : i32
    %c0_i32_1 = arith.constant 0 : i32
    return %c0_i32, %c0_i32_0 : i32, i32
  }
  func.func @transform_8(%arg0: i32) -> (i32, i32) {
    %c0_i32 = arith.constant 0 : i32
    %c0_i32_0 = arith.constant 0 : i32
    %c0_i32_1 = arith.constant 0 : i32
    return %c0_i32, %c0_i32_0 : i32, i32
  }
  func.func @transform_9(%arg0: i32) -> (i32, i32) {
    %c0_i32 = arith.constant 0 : i32
    %c0_i32_0 = arith.constant 0 : i32
    %c0_i32_1 = arith.constant 0 : i32
    return %c0_i32, %c0_i32_0 : i32, i32
  }
  func.func @transform_10(%arg0: i32) -> (i32, i32) {
    %c0_i32 = arith.constant 0 : i32
    %c0_i32_0 = arith.constant 0 : i32
    return %arg0, %c0_i32 : i32, i32
  }
  func.func @transform_11(%arg0: i32) -> (i32, i32, i32) {
    %c0_i32 = arith.constant 0 : i32
    %c0_i32_0 = arith.constant 0 : i32
    %c0_i32_1 = arith.constant 0 : i32
    return %arg0, %c0_i32, %c0_i32_0 : i32, i32, i32
  }
}

</mosaic_0001>

<llo_original>
// kernel: coupling_layer_direct.1
$region0: #{coupling_layer_direct.1}
  #allocation0 [shape = 'u32[]', space=smem, size = 0x4, offset = 0x4, fixed_abs, tag = 'smem constant byte address 0x4 - core index']
  #allocation1 [shape = 'u32[72,128]{1,0:T(1,128)}', space=vmem, size = 0x9000, scoped, tag = 'internal scratch']
  %s0 = inlined_call_operand.vmem [shape: f32[8,128], index: 0, kind: input, shape index: {}]
  %s1 = inlined_call_operand.vmem [shape: f32[1,128], index: 1, kind: input, shape index: {}]
  %s2 = inlined_call_operand.vmem [shape: f32[1,128], index: 2, kind: input, shape index: {}]
  %s3 = inlined_call_operand.vmem [shape: f32[1,128], index: 3, kind: input, shape index: {}]
  %s4 = inlined_call_operand.hbm [shape: bf16[128,128], index: 4, kind: input, shape index: {}]
  %s5 = inlined_call_operand.vmem [shape: f32[1,128], index: 5, kind: input, shape index: {}]
  %s6 = inlined_call_operand.hbm [shape: bf16[128,128], index: 6, kind: input, shape index: {}]
  %s7 = inlined_call_operand.vmem [shape: f32[1,128], index: 7, kind: input, shape index: {}]
  %s8 = inlined_call_operand.hbm [shape: bf16[128,256], index: 8, kind: input, shape index: {}]
  %s9 = inlined_call_operand.vmem [shape: f32[1,256], index: 9, kind: input, shape index: {}]
  %s10 = inlined_call_operand.hbm [shape: f32[8,128], index: 10, kind: output, shape index: {0}]
  %s11 = inlined_call_operand.hbm [shape: f32[1,1,8], index: 11, kind: output, shape index: {1}]
  %12 = xla_tuple %s10, %s11
  %s13 = sld [smem:[#allocation0]]
  $region70: #{coupling_layer_direct.1} parent=0
    _
  %s15 = ssub.s32 1, %s13
  %s16 = scalar_select 0, %s15, %s13
  $region1: #{coupling_layer_direct.1} parent=0
    #allocation2 [shape = 'u8[32768]{0}', space=vmem, size = 0x8000, scoped, tag = 'input window, operand 4, single buffered']
    #allocation3 [shape = 's32[1]{0}', space=sflag, size = 0x4, scoped, tag = 'scoped memory for coupling_layer_direct.1']
    #allocation4 [shape = 's32[1]{0}', space=sflag, size = 0x4, scoped, tag = 'scoped memory for coupling_layer_direct.1']
    #allocation5 [shape = 'u8[32768]{0}', space=vmem, size = 0x8000, scoped, tag = 'input window, operand 6, single buffered']
    #allocation6 [shape = 's32[1]{0}', space=sflag, size = 0x4, scoped, tag = 'scoped memory for coupling_layer_direct.1']
    #allocation7 [shape = 'u8[65536]{0}', space=vmem, size = 0x10000, scoped, tag = 'input window, operand 8, single buffered']
    #allocation8 [shape = 'u8[4096]{0}', space=vmem, size = 0x1000, scoped, tag = 'output window, operand 0, single buffered']
    #allocation9 [shape = 'u8[512]{0}', space=vmem, size = 0x400, scoped, tag = 'output window, operand 1, single buffered']
    #allocation10 [shape = 's32[1]{0}', space=sflag, size = 0x4, scoped, tag = 'scoped memory for coupling_layer_direct.1']
    %17 = vsyncpa [#allocation3], 0
    %18 = vsyncpa [#allocation6], 0
    %19 = vsyncpa [#allocation4], 0
    %20 = vsyncpa [#allocation10], 0
    // Predicated region
    $region2: #{coupling_layer_direct.1} parent=1 // pred_check
      _
    $region3: #{coupling_layer_direct.1} parent=1 // pred_check_branch
      %22 = sbr.rel (0) target = $region5
    $region4: #{coupling_layer_direct.1} parent=1 // pred_region
      _
    $region5: #{coupling_layer_direct.1} parent=1 // pred_fallthru
      _
    // Predicated region
    $region6: #{coupling_layer_direct.1} parent=1 // pred_check
      _
    $region7: #{coupling_layer_direct.1} parent=1 // pred_check_branch
      %24 = sbr.rel (0) target = $region9
    $region8: #{coupling_layer_direct.1} parent=1 // pred_region
      _
    $region9: #{coupling_layer_direct.1} parent=1 // pred_fallthru
      _
    // Predicated region
    $region10: #{coupling_layer_direct.1} parent=1 // pred_check
      _
    $region11: #{coupling_layer_direct.1} parent=1 // pred_check_branch
      %26 = sbr.rel (0) target = $region13
    $region12: #{coupling_layer_direct.1} parent=1 // pred_region
      _
    $region13: #{coupling_layer_direct.1} parent=1 // pred_fallthru
      _
    // Predicated region
    $region14: #{coupling_layer_direct.1} parent=1 // pred_check
      _
    $region15: #{coupling_layer_direct.1} parent=1 // pred_check_branch
      %28 = sbr.rel (0) target = $region17
    $region16: #{coupling_layer_direct.1} parent=1 // pred_region
      _
    $region17: #{coupling_layer_direct.1} parent=1 // pred_fallthru
      _
    // Predicated region
    $region18: #{coupling_layer_direct.1} parent=1 // pred_check
      _
    $region19: #{coupling_layer_direct.1} parent=1 // pred_check_branch
      %30 = sbr.rel (0) target = $region21
    $region20: #{coupling_layer_direct.1} parent=1 // pred_region
      %32 = vsyncadd [#allocation3], 0
      %s33 = sshll.u32 %s4, 4
      %s34 = int_to_ptr.hbm [resolvable:$true] %s33
      %s35 = sshll.u32 [#allocation2], 4
      %s36 = int_to_ptr.vmem [resolvable:$true] %s35
      %41 = dma.hbm_to_vmem [thread:$0]  %s34, 1024, %s36, [#allocation3], 64, 64, 4
    $region21: #{coupling_layer_direct.1} parent=1 // pred_fallthru
      _
    // Predicated region
    $region22: #{coupling_layer_direct.1} parent=1 // pred_check
      _
    $region23: #{coupling_layer_direct.1} parent=1 // pred_check_branch
      %43 = sbr.rel (0) target = $region25
    $region24: #{coupling_layer_direct.1} parent=1 // pred_region
      _
    $region25: #{coupling_layer_direct.1} parent=1 // pred_fallthru
      _
    // Predicated region
    $region26: #{coupling_layer_direct.1} parent=1 // pred_check
      _
    $region27: #{coupling_layer_direct.1} parent=1 // pred_check_branch
      %45 = sbr.rel (0) target = $region29
    $region28: #{coupling_layer_direct.1} parent=1 // pred_region
      %47 = vsyncadd [#allocation6], 0
      %s48 = sshll.u32 %s6, 4
      %s49 = int_to_ptr.hbm [resolvable:$true] %s48
      %s50 = sshll.u32 [#allocation5], 4
      %s51 = int_to_ptr.vmem [resolvable:$true] %s50
      %56 = dma.hbm_to_vmem [thread:$0]  %s49, 1024, %s51, [#allocation6], 64, 64, 4
    $region29: #{coupling_layer_direct.1} parent=1 // pred_fallthru
      _
    // Predicated region
    $region30: #{coupling_layer_direct.1} parent=1 // pred_check
      _
    $region31: #{coupling_layer_direct.1} parent=1 // pred_check_branch
      %58 = sbr.rel (0) target = $region33
    $region32: #{coupling_layer_direct.1} parent=1 // pred_region
      _
    $region33: #{coupling_layer_direct.1} parent=1 // pred_fallthru
      _
    // Predicated region
    $region34: #{coupling_layer_direct.1} parent=1 // pred_check
      _
    $region35: #{coupling_layer_direct.1} parent=1 // pred_check_branch
      %60 = sbr.rel (0) target = $region37
    $region36: #{coupling_layer_direct.1} parent=1 // pred_region
      %62 = vsyncadd [#allocation6], 0
      %s63 = sshll.u32 %s8, 4
      %s64 = int_to_ptr.hbm [resolvable:$true] %s63
      %s65 = sshll.u32 [#allocation7], 4
      %s66 = int_to_ptr.vmem [resolvable:$true] %s65
      %71 = dma.hbm_to_vmem [thread:$0]  %s64, 2048, %s66, [#allocation6], 128, 128, 8
    $region37: #{coupling_layer_direct.1} parent=1 // pred_fallthru
      _
    // Predicated region
    $region38: #{coupling_layer_direct.1} parent=1 // pred_check
      _
    $region39: #{coupling_layer_direct.1} parent=1 // pred_check_branch
      %73 = sbr.rel (0) target = $region41
    $region40: #{coupling_layer_direct.1} parent=1 // pred_region
      _
    $region41: #{coupling_layer_direct.1} parent=1 // pred_fallthru
      _
    // Predicated region
    $region42: #{coupling_layer_direct.1} parent=1 // pred_check
      _
    $region43: #{coupling_layer_direct.1} parent=1 // pred_check_branch
      %75 = sbr.rel (0) target = $region45
    $region44: #{coupling_layer_direct.1} parent=1 // pred_region
      %77 = dma.done [#allocation3], 1024
    $region45: #{coupling_layer_direct.1} parent=1 // pred_fallthru
      _
    // Predicated region
    $region46: #{coupling_layer_direct.1} parent=1 // pred_check
      _
    $region47: #{coupling_layer_direct.1} parent=1 // pred_check_branch
      %79 = sbr.rel (0) target = $region49
    $region48: #{coupling_layer_direct.1} parent=1 // pred_region
      %81 = dma.done [#allocation6], 1024
    $region49: #{coupling_layer_direct.1} parent=1 // pred_fallthru
      _
    // Predicated region
    $region50: #{coupling_layer_direct.1} parent=1 // pred_check
      _
    $region51: #{coupling_layer_direct.1} parent=1 // pred_check_branch
      %83 = sbr.rel (0) target = $region53
    $region52: #{coupling_layer_direct.1} parent=1 // pred_region
      %85 = dma.done [#allocation6], 2048
    $region53: #{coupling_layer_direct.1} parent=1 // pred_fallthru
      _
    %v86 = vld [vmem:[%s0] sm:$0xff]
    %v87 = vld [vmem:[%s1] sm:$0x1]
    %v88 = vld [vmem:[%s2] sm:$0x1]
    %v89 = vld [vmem:[%s3] sm:$0x1]
    %vm90 = vcmp.gt.f32.partialorder %v89, 0.5
    %v91 = vsel %vm90, 1, 0
    %v92 = vperm.slane %v91, 0
    %vm93 = vcmp.eq.s32.totalorder %v92, 1
    %v95 = vperm.slane %v87, 0
    %v97 = vmul.f32 %v86, %v95
    %v98 = vpack.c.bf16 %v97, %v97
    %v99 = vld [vmem:[#allocation2] sm:$0xf]
    %v100 = vld [vmem:[#allocation2 + $0x4] sm:$0xf]
    %v101 = vld [vmem:[#allocation2 + $0x8] sm:$0xf]
    %v102 = vld [vmem:[#allocation2 + $0xc] sm:$0xf]
    %v103 = vld [vmem:[#allocation2 + $0x10] sm:$0xf]
    %v104 = vld [vmem:[#allocation2 + $0x14] sm:$0xf]
    %v105 = vld [vmem:[#allocation2 + $0x18] sm:$0xf]
    %v106 = vld [vmem:[#allocation2 + $0x1c] sm:$0xf]
    %v107 = vld [vmem:[#allocation2 + $0x20] sm:$0xf]
    %v108 = vld [vmem:[#allocation2 + $0x24] sm:$0xf]
    %v109 = vld [vmem:[#allocation2 + $0x28] sm:$0xf]
    %v110 = vld [vmem:[#allocation2 + $0x2c] sm:$0xf]
    %v111 = vld [vmem:[#allocation2 + $0x30] sm:$0xf]
    %v112 = vld [vmem:[#allocation2 + $0x34] sm:$0xf]
    %v113 = vld [vmem:[#allocation2 + $0x38] sm:$0xf]
    %v114 = vld [vmem:[#allocation2 + $0x3c] sm:$0xf]
    %v115 = vld [vmem:[%s5] sm:$0x1]
    %v117 = vperm.slane %v115, 0
    %v135 = vunpack.c.l.b16 %v99
    %v136 = vunpack.c.l.b16 %v100
    %v137 = vunpack.c.l.b16 %v101
    %v138 = vunpack.c.l.b16 %v102
    %v139 = vunpack.c.l.b16 %v103
    %v140 = vunpack.c.l.b16 %v104
    %v141 = vunpack.c.l.b16 %v105
    %v142 = vunpack.c.l.b16 %v106
    %v143 = vunpack.c.l.b16 %v107
    %v144 = vunpack.c.l.b16 %v108
    %v145 = vunpack.c.l.b16 %v109
    %v146 = vunpack.c.l.b16 %v110
    %v147 = vunpack.c.l.b16 %v111
    %v148 = vunpack.c.l.b16 %v112
    %v149 = vunpack.c.l.b16 %v113
    %v150 = vunpack.c.l.b16 %v114
    %v151 = vpack.c.b16 %v136, %v135
    %v152 = vpack.c.b16 %v138, %v137
    %v153 = vpack.c.b16 %v140, %v139
    %v154 = vpack.c.b16 %v142, %v141
    %v155 = vpack.c.b16 %v144, %v143
    %v156 = vpack.c.b16 %v146, %v145
    %v157 = vpack.c.b16 %v148, %v147
    %v158 = vpack.c.b16 %v150, %v149
    %167 = vmatpush.bf16.msra.mxu0 %v158
    %168 = vmatpush.bf16.msra.mxu0 %v157
    %169 = vmatpush.bf16.msra.mxu0 %v156
    %170 = vmatpush.bf16.msra.mxu0 %v155
    %171 = vmatpush.bf16.msra.mxu0 %v154
    %172 = vmatpush.bf16.msra.mxu0 %v153
    %173 = vmatpush.bf16.msra.mxu0 %v152
    %174 = vmatpush.bf16.msra.mxu0 %v151
    %175 = vmatmul.bf16.gmra.mxu0 %v98
    %v176 = vpop.f32.mrf.mxu0
    %v177 = vadd.f32 %v117, %v176
    %v178 = vpop.f32.mrf.mxu0
    %179 = vdwg.mxu0
    %v180 = vtanh.pop %v177
    %v181 = vmax.f32 %v177, 0.0
    %v182 = vsel %vm93, %v180, %v181
    %v183 = vpack.c.bf16 %v182, %v182
    %v184 = vld [vmem:[#allocation5] sm:$0xf]
    %v185 = vld [vmem:[#allocation5 + $0x4] sm:$0xf]
    %v186 = vld [vmem:[#allocation5 + $0x8] sm:$0xf]
    %v187 = vld [vmem:[#allocation5 + $0xc] sm:$0xf]
    %v188 = vld [vmem:[#allocation5 + $0x10] sm:$0xf]
    %v189 = vld [vmem:[#allocation5 + $0x14] sm:$0xf]
    %v190 = vld [vmem:[#allocation5 + $0x18] sm:$0xf]
    %v191 = vld [vmem:[#allocation5 + $0x1c] sm:$0xf]
    %v192 = vld [vmem:[#allocation5 + $0x20] sm:$0xf]
    %v193 = vld [vmem:[#allocation5 + $0x24] sm:$0xf]
    %v194 = vld [vmem:[#allocation5 + $0x28] sm:$0xf]
    %v195 = vld [vmem:[#allocation5 + $0x2c] sm:$0xf]
    %v196 = vld [vmem:[#allocation5 + $0x30] sm:$0xf]
    %v197 = vld [vmem:[#allocation5 + $0x34] sm:$0xf]
    %v198 = vld [vmem:[#allocation5 + $0x38] sm:$0xf]
    %v199 = vld [vmem:[#allocation5 + $0x3c] sm:$0xf]
    %v200 = vld [vmem:[%s7] sm:$0x1]
    %v202 = vperm.slane %v200, 0
    %v220 = vunpack.c.l.b16 %v184
    %v221 = vunpack.c.l.b16 %v185
    %v222 = vunpack.c.l.b16 %v186
    %v223 = vunpack.c.l.b16 %v187
    %v224 = vunpack.c.l.b16 %v188
    %v225 = vunpack.c.l.b16 %v189
    %v226 = vunpack.c.l.b16 %v190
    %v227 = vunpack.c.l.b16 %v191
    %v228 = vunpack.c.l.b16 %v192
    %v229 = vunpack.c.l.b16 %v193
    %v230 = vunpack.c.l.b16 %v194
    %v231 = vunpack.c.l.b16 %v195
    %v232 = vunpack.c.l.b16 %v196
    %v233 = vunpack.c.l.b16 %v197
    %v234 = vunpack.c.l.b16 %v198
    %v235 = vunpack.c.l.b16 %v199
    %v236 = vpack.c.b16 %v221, %v220
    %v237 = vpack.c.b16 %v223, %v222
    %v238 = vpack.c.b16 %v225, %v224
    %v239 = vpack.c.b16 %v227, %v226
    %v240 = vpack.c.b16 %v229, %v228
    %v241 = vpack.c.b16 %v231, %v230
    %v242 = vpack.c.b16 %v233, %v232
    %v243 = vpack.c.b16 %v235, %v234
    %252 = vmatpush.bf16.msra.mxu0 %v243
    %253 = vmatpush.bf16.msra.mxu0 %v242
    %254 = vmatpush.bf16.msra.mxu0 %v241
    %255 = vmatpush.bf16.msra.mxu0 %v240
    %256 = vmatpush.bf16.msra.mxu0 %v239
    %257 = vmatpush.bf16.msra.mxu0 %v238
    %258 = vmatpush.bf16.msra.mxu0 %v237
    %259 = vmatpush.bf16.msra.mxu0 %v236
    %260 = vmatmul.bf16.gmra.mxu0 %v183
    %v261 = vpop.f32.mrf.mxu0
    %v262 = vadd.f32 %v202, %v261
    %v263 = vpop.f32.mrf.mxu0
    %264 = vdwg.mxu0
    %v265 = vtanh.pop %v262
    %v266 = vmax.f32 %v262, 0.0
    %v267 = vsel %vm93, %v265, %v266
    %v268 = vpack.c.bf16 %v267, %v267
    %v269 = vld [vmem:[#allocation7] sm:$0xff]
    %v270 = vld [vmem:[#allocation7 + $0x8] sm:$0xff]
    %v271 = vld [vmem:[#allocation7 + $0x10] sm:$0xff]
    %v272 = vld [vmem:[#allocation7 + $0x18] sm:$0xff]
    %v273 = vld [vmem:[#allocation7 + $0x20] sm:$0xff]
    %v274 = vld [vmem:[#allocation7 + $0x28] sm:$0xff]
    %v275 = vld [vmem:[#allocation7 + $0x30] sm:$0xff]
    %v276 = vld [vmem:[#allocation7 + $0x38] sm:$0xff]
    %v277 = vld [vmem:[#allocation7 + $0x40] sm:$0xff]
    %v278 = vld [vmem:[#allocation7 + $0x48] sm:$0xff]
    %v279 = vld [vmem:[#allocation7 + $0x50] sm:$0xff]
    %v280 = vld [vmem:[#allocation7 + $0x58] sm:$0xff]
    %v281 = vld [vmem:[#allocation7 + $0x60] sm:$0xff]
    %v282 = vld [vmem:[#allocation7 + $0x68] sm:$0xff]
    %v283 = vld [vmem:[#allocation7 + $0x70] sm:$0xff]
    %v284 = vld [vmem:[#allocation7 + $0x78] sm:$0xff]
    %v285 = vld [vmem:[%s9] sm:$0x3]
    %v287 = vperm.slane %v285, 0
    %v288 = vperm.slane %v285, 1
    %v307 = vunpack.c.l.b16 %v269
    %v308 = vunpack.c.h.b16 %v269
    %v309 = vunpack.c.l.b16 %v270
    %v310 = vunpack.c.h.b16 %v270
    %v311 = vunpack.c.l.b16 %v271
    %v312 = vunpack.c.h.b16 %v271
    %v313 = vunpack.c.l.b16 %v272
    %v314 = vunpack.c.h.b16 %v272
    %v315 = vunpack.c.l.b16 %v273
    %v316 = vunpack.c.h.b16 %v273
    %v317 = vunpack.c.l.b16 %v274
    %v318 = vunpack.c.h.b16 %v274
    %v319 = vunpack.c.l.b16 %v275
    %v320 = vunpack.c.h.b16 %v275
    %v321 = vunpack.c.l.b16 %v276
    %v322 = vunpack.c.h.b16 %v276
    %v323 = vunpack.c.l.b16 %v277
    %v324 = vunpack.c.h.b16 %v277
    %v325 = vunpack.c.l.b16 %v278
    %v326 = vunpack.c.h.b16 %v278
    %v327 = vunpack.c.l.b16 %v279
    %v328 = vunpack.c.h.b16 %v279
    %v329 = vunpack.c.l.b16 %v280
    %v330 = vunpack.c.h.b16 %v280
    %v331 = vunpack.c.l.b16 %v281
    %v332 = vunpack.c.h.b16 %v281
    %v333 = vunpack.c.l.b16 %v282
    %v334 = vunpack.c.h.b16 %v282
    %v335 = vunpack.c.l.b16 %v283
    %v336 = vunpack.c.h.b16 %v283
    %v337 = vunpack.c.l.b16 %v284
    %v338 = vunpack.c.h.b16 %v284
    %v339 = vpack.c.b16 %v309, %v307
    %v340 = vpack.c.b16 %v310, %v308
    %v341 = vpack.c.b16 %v313, %v311
    %v342 = vpack.c.b16 %v314, %v312
    %v343 = vpack.c.b16 %v317, %v315
    %v344 = vpack.c.b16 %v318, %v316
    %v345 = vpack.c.b16 %v321, %v319
    %v346 = vpack.c.b16 %v322, %v320
    %v347 = vpack.c.b16 %v325, %v323
    %v348 = vpack.c.b16 %v326, %v324
    %v349 = vpack.c.b16 %v329, %v327
    %v350 = vpack.c.b16 %v330, %v328
    %v351 = vpack.c.b16 %v333, %v331
    %v352 = vpack.c.b16 %v334, %v332
    %v353 = vpack.c.b16 %v337, %v335
    %v354 = vpack.c.b16 %v338, %v336
    %371 = vmatpush.bf16.msra.mxu0 %v353
    %372 = vmatpush.bf16.msra.mxu0 %v351
    %373 = vmatpush.bf16.msra.mxu0 %v349
    %374 = vmatpush.bf16.msra.mxu0 %v347
    %375 = vmatpush.bf16.msra.mxu0 %v345
    %376 = vmatpush.bf16.msra.mxu0 %v343
    %377 = vmatpush.bf16.msra.mxu0 %v341
    %378 = vmatpush.bf16.msra.mxu0 %v339
    %379 = vmatmul.bf16.gmra.mxu0 %v268
    %v380 = vpop.f32.mrf.mxu0
    %v381 = vadd.f32 %v287, %v380
    %v382 = vpop.f32.mrf.mxu0
    %383 = vdwg.mxu0
    %384 = vmatpush.bf16.msra.mxu0 %v354
    %385 = vmatpush.bf16.msra.mxu0 %v352
    %386 = vmatpush.bf16.msra.mxu0 %v350
    %387 = vmatpush.bf16.msra.mxu0 %v348
    %388 = vmatpush.bf16.msra.mxu0 %v346
    %389 = vmatpush.bf16.msra.mxu0 %v344
    %390 = vmatpush.bf16.msra.mxu0 %v342
    %391 = vmatpush.bf16.msra.mxu0 %v340
    %392 = vmatmul.bf16.gmra.mxu0 %v268
    %v393 = vpop.f32.mrf.mxu0
    %v394 = vadd.f32 %v288, %v393
    %v395 = vpop.f32.mrf.mxu0
    %396 = vdwg.mxu0
    %v398 = vperm.slane %v88, 0
    %v400 = vmul.f32 %v381, %v398
    %v401 = vmul.f32 %v394, %v398
    %v402 = vmul.f32 %v400, 1.442695
    %v403 = vpow.pop %v402
    %v404 = vmul.f32 %v86, %v403
    %v405 = vadd.f32 %v404, %v401
    %406 = vst [vmem:[#allocation8] sm:$0xff] %v405
    %407 = vadd.xlane.f32.xlu0 %v400
    %v408 = vpop.xlane.xlu0 %407
    %v410 = vlaneseq
    %v411 = vand.u32 %v410, 127
    %v412 = vperm.slane %v408, %v411
    %vm414 = vcmask 57344
    %415 = vst.msk [vmem:[#allocation9] sm:$0x1] %vm414, %v412
    // Predicated region
    $region54: #{coupling_layer_direct.1} parent=1 // pred_check
      _
    $region55: #{coupling_layer_direct.1} parent=1 // pred_check_branch
      %417 = sbr.rel (0) target = $region57
    $region56: #{coupling_layer_direct.1} parent=1 // pred_region
      %419 = vsyncadd [#allocation4], 0
      %s421 = sshll.u32 [#allocation8], 4
      %s422 = int_to_ptr.vmem [resolvable:$true] %s421
      %s423 = sshll.u32 %s10, 4
      %s424 = int_to_ptr.hbm [resolvable:$true] %s423
      %426 = dma.vmem_to_hbm [thread:$0]  %s422, 128, %s424, [#allocation4]
    $region57: #{coupling_layer_direct.1} parent=1 // pred_fallthru
      _
    // Predicated region
    $region58: #{coupling_layer_direct.1} parent=1 // pred_check
      _
    $region59: #{coupling_layer_direct.1} parent=1 // pred_check_branch
      %428 = sbr.rel (0) target = $region61
    $region60: #{coupling_layer_direct.1} parent=1 // pred_region
      %430 = vsyncadd [#allocation10], 0
      %s432 = sshll.u32 [#allocation9], 4
      %s433 = int_to_ptr.vmem [resolvable:$true] %s432
      %s434 = sshll.u32 %s11, 4
      %s435 = int_to_ptr.hbm [resolvable:$true] %s434
      %437 = dma.vmem_to_hbm [thread:$0]  %s433, 16, %s435, [#allocation10]
    $region61: #{coupling_layer_direct.1} parent=1 // pred_fallthru
      _
    // Predicated region
    $region62: #{coupling_layer_direct.1} parent=1 // pred_check
      _
    $region63: #{coupling_layer_direct.1} parent=1 // pred_check_branch
      %439 = sbr.rel (0) target = $region65
    $region64: #{coupling_layer_direct.1} parent=1 // pred_region
      %441 = dma.done [#allocation4], 128
    $region65: #{coupling_layer_direct.1} parent=1 // pred_fallthru
      _
    // Predicated region
    $region66: #{coupling_layer_direct.1} parent=1 // pred_check
      _
    $region67: #{coupling_layer_direct.1} parent=1 // pred_check_branch
      %443 = sbr.rel (0) target = $region69
    $region68: #{coupling_layer_direct.1} parent=1 // pred_region
      %445 = dma.done [#allocation10], 16
    $region69: #{coupling_layer_direct.1} parent=1 // pred_fallthru
      _
    %446 = vsyncpa [#allocation3], 1
    %447 = vsyncpa [#allocation6], 1
    %448 = vsyncpa [#allocation4], 1
    %449 = vsyncpa [#allocation10], 1

</llo_original>
